<compile_context>
chip_gen: v7x
topology: tpu7x:2x2x1
jax: 0.10.0
libtpu: 0.0.40
codegen_flags: <defaults>
</compile_context>

<pallas_src>
import functools
import math

import jax
import jax.numpy as jnp
from jax import lax
from jax.experimental import pallas as pl
from jax.experimental.pallas import tpu as pltpu


def _round_up(x, m):
    return ((x + m - 1) // m) * m


def _vmem_capacity_bytes():
    try:
        return int(pltpu.get_tpu_info().vmem_capacity_bytes)
    except Exception:
        return 64 * 1024 * 1024          # v7x-safe conservative fallback


# ------------------------------ Pallas kernels --------------------------------
def _torgb_kernel(w_ref, b_ref, x_ref, o_ref, *, compute_dtype):
    # w_ref: (1, OC, C)   per-batch modulated weight (f32, resident per batch)
    # b_ref: (OC, 1)      bias column (f32, resident)
    # x_ref: (1, C, TS)   input slab in its native dtype; cast per-tile here
    # o_ref: (1, OC, TS)  lane-dense output tile
    acc = jnp.dot(w_ref[0].astype(compute_dtype),
                  x_ref[0].astype(compute_dtype),
                  preferred_element_type=jnp.float32)
    o_ref[0] = (acc + b_ref[...]).astype(o_ref.dtype)


def _torgb_skip_kernel(w_ref, b_ref, x_ref, s_ref, o_ref, *, compute_dtype):
    # Same as above with the (upsampled) skip-connection add fused into the store.
    acc = jnp.dot(w_ref[0].astype(compute_dtype),
                  x_ref[0].astype(compute_dtype),
                  preferred_element_type=jnp.float32)
    o_ref[0] = (acc + b_ref[...] + s_ref[0].astype(jnp.float32)).astype(o_ref.dtype)


# ------------------------------ tile selection ---------------------------------
def _pick_spatial_tile(HW_pad, N, C, OC, x_itemsize, s_itemsize, has_skip):
    """Largest 128-multiple divisor of HW_pad that fits ~1/4 of VMEM, caps at
    8192 columns, and leaves >= 4 grid programs (feeds both v7x TensorCores)."""
    budget = _vmem_capacity_bytes() // 4
    per_col = 2 * (C * x_itemsize + OC * 4)               # double-buffered x + out
    if has_skip:
        per_col += 2 * OC * s_itemsize
    ts_cap = (budget // max(per_col, 1)) // 128 * 128
    ts_cap = max(128, min(ts_cap, 8192))

    m = HW_pad // 128
    min_steps = min(4, N * m)
    best = 128
    for d in range(1, m + 1):
        if m % d:
            continue
        ts = 128 * d
        if ts > ts_cap:
            break
        if N * (m // d) >= min_steps:
            best = ts
    return best


# ------------------------------ Pallas wrapper ---------------------------------
def torgb_conv_pallas(x, w_mod, bias, skip=None, *, compute_dtype=jnp.bfloat16):
    """out[n,oc] = sum_c w_mod[n,oc,c] * x[n,c] + bias[oc] (+ skip), NCHW layout."""
    N, C, H, W = x.shape
    OC = w_mod.shape[1]
    HW = H * W
    out_dtype = x.dtype
    has_skip = skip is not None

    # Free reshape; x streams from HBM in its native dtype (no pad/astype copy).
    x_flat = x.reshape(N, C, HW)
    s_flat = skip.reshape(N, OC, HW) if has_skip else None

    aligned = (HW % 128 == 0)
    HW_pad = HW if aligned else _round_up(HW, 128)
    if not aligned:
        # TODO(synk): unaligned-spatial fallback pads + slices; real ToRGB
        # resolutions (powers of two >= 16x8) always take the aligned path.
        x_flat = jnp.pad(x_flat, ((0, 0), (0, 0), (0, HW_pad - HW)))
        if has_skip:
            s_flat = jnp.pad(s_flat, ((0, 0), (0, 0), (0, HW_pad - HW)))

    x_item = jnp.dtype(x_flat.dtype).itemsize
    s_item = jnp.dtype(s_flat.dtype).itemsize if has_skip else 0
    out_item = jnp.dtype(out_dtype).itemsize
    TS = _pick_spatial_tile(HW_pad, N, C, OC, x_item, s_item, has_skip)
    grid = (N, HW_pad // TS)

    w = w_mod.astype(jnp.float32)                          # tiny (N, OC, C)
    b = bias.astype(jnp.float32).reshape(OC, 1)

    inputs = [w, b, x_flat]
    in_specs = [
        pl.BlockSpec((1, OC, C), lambda n, j: (n, 0, 0)),  # per-batch weight, resident
        pl.BlockSpec((OC, 1), lambda n, j: (0, 0)),        # resident bias
        pl.BlockSpec((1, C, TS), lambda n, j: (n, 0, j)),  # streamed input (native dtype)
    ]
    kernel = functools.partial(_torgb_kernel, compute_dtype=compute_dtype)
    if has_skip:
        inputs.append(s_flat)
        in_specs.append(pl.BlockSpec((1, OC, TS), lambda n, j: (n, 0, j)))
        kernel = functools.partial(_torgb_skip_kernel, compute_dtype=compute_dtype)

    # Explicit VMEM budget: double-buffered streamed tiles + resident weight/bias.
    vmem_need = (2 * C * TS * x_item
                 + 2 * OC * TS * out_item
                 + (2 * OC * TS * s_item if has_skip else 0)
                 + 2 * OC * C * 4
                 + 2 * OC * 128 * 4
                 + (1 << 20))
    cap = _vmem_capacity_bytes()
    vmem_limit = int(min(cap * 3 // 4, max(2 * vmem_need, 16 * 1024 * 1024)))

    bytes_accessed = (N * C * HW_pad * x_item + w.size * 4 + b.size * 4
                      + N * OC * HW_pad * out_item
                      + (N * OC * HW_pad * s_item if has_skip else 0))

    out = pl.pallas_call(
        kernel,
        out_shape=jax.ShapeDtypeStruct((N, OC, HW_pad), out_dtype),
        grid=grid,
        in_specs=in_specs,
        out_specs=pl.BlockSpec((1, OC, TS), lambda n, j: (n, 0, j)),
        compiler_params=pltpu.CompilerParams(
            dimension_semantics=("parallel", "parallel"),
            vmem_limit_bytes=vmem_limit,
        ),
        cost_estimate=pl.CostEstimate(
            flops=2 * N * OC * C * HW_pad,
            transcendentals=0,
            bytes_accessed=int(bytes_accessed),
        ),
    )(*inputs)

    if not aligned:
        out = out[:, :, :HW]
    return out.reshape(N, OC, H, W)


# -------------------------- skip-branch blur upsample --------------------------
def _make_blur_kernel(k):
    k = jnp.asarray(k, jnp.float32)
    if k.ndim == 1:
        k = k[None, :] * k[:, None]
    return k / jnp.sum(k)


def _upfirdn2d_up2(x, kernel, pad):
    # upfirdn2d(x, kernel, up=2, down=1, pad=pad) on NCHW input.
    # TODO(synk): skip-branch blur upsample kept in XLA (tiny depthwise 4-tap
    # FIR); fusing it into the Pallas epilogue (zero-insert + separable FIR on
    # the VPU/XLU) would remove one HBM round trip of the upsampled skip.
    N, C, H, W = x.shape
    kh, kw = kernel.shape
    k = jnp.flip(kernel, (0, 1)).astype(x.dtype)[None, None]
    k = jnp.broadcast_to(k, (C, 1, kh, kw))
    return lax.conv_general_dilated(
        x, k, window_strides=(1, 1),
        padding=((pad[0], pad[1] + 1), (pad[0], pad[1] + 1)),  # +1 = trailing zero of up=2
        lhs_dilation=(2, 2),
        dimension_numbers=("NCHW", "OIHW", "NCHW"),
        feature_group_count=C)


def _upfirdn2d_up2_ref(x, kernel, pad):
    # Independent reference for upfirdn2d(up=2, down=1): explicit trailing-zero
    # insertion (PyTorch native semantics), explicit pad, VALID correlation with
    # the flipped kernel.  Used to validate _upfirdn2d_up2's lhs_dilation trick.
    N, C, H, W = x.shape
    kh, kw = kernel.shape
    up = jnp.zeros((N, C, 2 * H, 2 * W), x.dtype).at[:, :, ::2, ::2].set(x)
    up = jnp.pad(up, ((0, 0), (0, 0), (pad[0], pad[1]), (pad[0], pad[1])))
    k = jnp.flip(kernel, (0, 1)).astype(x.dtype)[None, None]
    k = jnp.broadcast_to(k, (C, 1, kh, kw))
    return lax.conv_general_dilated(
        up, k, window_strides=(1, 1), padding="VALID",
        dimension_numbers=("NCHW", "OIHW", "NCHW"),
        feature_group_count=C)


# ----------------------------------- ToRGB -------------------------------------
class ToRGB:
    """JAX/Pallas port of the PyTorch ToRGB module (forward only)."""

    def __init__(self, in_channel, out_channel, style_dim, upsample=True,
                 blur_kernel=(1, 3, 3, 1), *, key=None, compute_dtype=jnp.bfloat16):
        if key is None:
            key = jax.random.PRNGKey(0)
        k_conv, k_mod = jax.random.split(key)
        self.in_channel = in_channel
        self.out_channel = out_channel
        self.style_dim = style_dim
        self.compute_dtype = compute_dtype

        # ModulatedConv2d(in_channel, out_channel, 1, style_dim, demodulate=False)
        # weight ~ randn(1, OC, C, 1, 1)  -> stored squeezed as (OC, C)
        self.conv_weight = jax.random.normal(
            k_conv, (out_channel, in_channel), jnp.float32)
        self.conv_scale = 1.0 / math.sqrt(in_channel * 1 * 1)

        # modulation = EqualLinear(style_dim, in_channel, bias_init=1), lr_mul=1
        self.mod_weight = jax.random.normal(
            k_mod, (in_channel, style_dim), jnp.float32)
        self.mod_bias = jnp.ones((in_channel,), jnp.float32)
        self.mod_scale = 1.0 / math.sqrt(style_dim)

        # ToRGB bias: zeros(1, OC, 1, 1)
        self.bias = jnp.zeros((out_channel,), jnp.float32)

        # Upsample(blur_kernel, factor=2) for the skip branch.
        self.upsample = bool(upsample)
        if upsample:
            self.up_kernel = _make_blur_kernel(blur_kernel) * (2 ** 2)
            p = self.up_kernel.shape[0] - 2
            self.up_pad = ((p + 1) // 2 + 1, p // 2)

    def _modulated_weight(self, style):
        # s = EqualLinear(style) = style @ (W_mod * scale).T + 1     (tiny, in XLA)
        s = style @ (self.mod_weight * self.mod_scale).T + self.mod_bias        # (N, C)
        return self.conv_scale * self.conv_weight[None, :, :] * s[:, None, :]   # (N, OC, C)

    def __call__(self, x, style, skip=None):
        w_mod = self._modulated_weight(style)
        skip_up = None
        if skip is not None:
            skip_up = (_upfirdn2d_up2(skip, self.up_kernel, self.up_pad)
                       if self.upsample else skip)
        return torgb_conv_pallas(x, w_mod, self.bias, skip_up,
                                 compute_dtype=self.compute_dtype)


# --------------------------------- reference ------------------------------------
def _reference_torgb(m, x, style, skip=None):
    # Exact-f32 elementwise reference (no MXU contraction on the reference side).
    w_full = m._modulated_weight(style)                                     # (N, OC, C)
    out = jnp.sum(w_full[:, :, :, None, None] * x[:, None, :, :, :], axis=2)
    out = out + m.bias.reshape(1, -1, 1, 1)
    if skip is not None:
        sk = _upfirdn2d_up2(skip, m.up_kernel, m.up_pad) if m.upsample else skip
        out = out + sk
    return out


# ----------------------------------- main ----------------------------------------
if __name__ == "__main__":
    key = jax.random.PRNGKey(0)
    k_param, k_x, k_style, k_skip = jax.random.split(key, 4)

    # Small shapes consistent with ToRGB: batch=2, in_channel=4, 16x16 feature
    # map, RGB out_channel=3, style_dim=32, skip at half resolution (8x8).
    N, C, H, W = 2, 4, 16, 16
    OC, STYLE_DIM = 3, 32

    x = jax.random.normal(k_x, (N, C, H, W), jnp.float32)
    style = jax.random.normal(k_style, (N, STYLE_DIM), jnp.float32)
    skip = jax.random.normal(k_skip, (N, OC, H // 2, W // 2), jnp.float32)

    # ---- independent upfirdn2d(up=2) semantics check (symmetric + asymmetric) ---
    for blur in ((1., 3., 3., 1.), (1., 2., 3., 4.)):
        kern = _make_blur_kernel(blur) * 4.0
        p = kern.shape[0] - 2
        pad = ((p + 1) // 2 + 1, p // 2)
        up_a = _upfirdn2d_up2(skip, kern, pad)
        up_b = _upfirdn2d_up2_ref(skip, kern, pad)
        assert up_a.shape == (N, OC, H, W)
        assert jnp.allclose(up_a, up_b, atol=1e-5, rtol=1e-5), \
            "upfirdn2d(up=2) lhs_dilation path mismatch vs explicit reference"

    # ---- f32 compute path: tight correctness check ------------------------------
    m32 = ToRGB(C, OC, STYLE_DIM, upsample=True, key=k_param,
                compute_dtype=jnp.float32)
    ref_skip = _reference_torgb(m32, x, style, skip)
    ref_noskip = _reference_torgb(m32, x, style, None)

    out_skip = jax.block_until_ready(m32(x, style, skip))
    assert out_skip.shape == (N, OC, H, W)
    assert jnp.allclose(out_skip, ref_skip, atol=1e-4, rtol=1e-4), \
        "f32 skip path mismatch vs reference"

    out_noskip = jax.block_until_ready(m32(x, style))
    assert jnp.allclose(out_noskip, ref_noskip, atol=1e-4, rtol=1e-4), \
        "f32 no-skip path mismatch vs reference"

    # ---- bf16 MXU-operand path (default): loose check ---------------------------
    mbf16 = ToRGB(C, OC, STYLE_DIM, upsample=True, key=k_param,
                  compute_dtype=jnp.bfloat16)
    out_bf16 = jax.block_until_ready(mbf16(x, style, skip))
    assert jnp.allclose(out_bf16, ref_skip, atol=1e-1, rtol=1e-1), \
        "bf16 path mismatch vs reference"

    print("KERNEL_OK")
</pallas_src>

<mosaic_0001>
module attributes {stable_mosaic.version = 11 : i64} {
  func.func @_torgb_skip_kernel(%arg0: i32, %arg1: i32, %arg2: memref<1x3x4xf32, #tpu.memory_space<vmem>>, %arg3: memref<3x1xf32, #tpu.memory_space<vmem>>, %arg4: memref<1x4x128xf32, #tpu.memory_space<vmem>>, %arg5: memref<1x3x128xf32, #tpu.memory_space<vmem>>, %arg6: memref<1x3x128xf32, #tpu.memory_space<vmem>>) attributes {dimension_semantics = [#tpu.dimension_semantics<parallel>, #tpu.dimension_semantics<parallel>], iteration_bounds = array<i64: 2, 2>, scalar_prefetch = 0 : i64, scratch_operands = 0 : i64, tpu.core_type = #tpu.core_type<tc>, window_params = [{transform_indices = @transform_0, window_bounds = array<i64: 1, 3, 4>}, {pipeline_mode = #tpu.pipeline_mode<synchronous>, transform_indices = @transform_1, window_bounds = array<i64: 3, 1>}, {transform_indices = @transform_2, window_bounds = array<i64: 1, 4, 128>}, {transform_indices = @transform_3, window_bounds = array<i64: 1, 3, 128>}, {transform_indices = @transform_4, window_bounds = array<i64: 1, 3, 128>}]} {
    %c0 = arith.constant 0 : index
    %c0_0 = arith.constant 0 : index
    %c0_1 = arith.constant 0 : index
    %0 = vector.load %arg2[%c0, %c0_0, %c0_1] : memref<1x3x4xf32, #tpu.memory_space<vmem>>, vector<1x3x4xf32>
    %1 = vector.shape_cast %0 : vector<1x3x4xf32> to vector<3x4xf32>
    %c0_2 = arith.constant 0 : index
    %c0_3 = arith.constant 0 : index
    %c0_4 = arith.constant 0 : index
    %2 = vector.load %arg4[%c0_2, %c0_3, %c0_4] : memref<1x4x128xf32, #tpu.memory_space<vmem>>, vector<1x4x128xf32>
    %3 = vector.shape_cast %2 : vector<1x4x128xf32> to vector<4x128xf32>
    %cst = arith.constant dense<0.000000e+00> : vector<3x128xf32>
    %4 = tpu.matmul %1, %3, %cst {dimension_numbers = #tpu.dot_dimension_numbers<[1], [0], [0], [1], [0, 0, 1, 1], [], []>} : vector<3x4xf32>, vector<4x128xf32>, vector<3x128xf32> -> vector<3x128xf32>
    %c0_5 = arith.constant 0 : index
    %c0_6 = arith.constant 0 : index
    %5 = vector.load %arg3[%c0_5, %c0_6] : memref<3x1xf32, #tpu.memory_space<vmem>>, vector<3x1xf32>
    %6 = vector.broadcast %5 : vector<3x1xf32> to vector<3x128xf32>
    %7 = arith.addf %4, %6 : vector<3x128xf32>
    %c0_7 = arith.constant 0 : index
    %c0_8 = arith.constant 0 : index
    %c0_9 = arith.constant 0 : index
    %8 = vector.load %arg5[%c0_7, %c0_8, %c0_9] : memref<1x3x128xf32, #tpu.memory_space<vmem>>, vector<1x3x128xf32>
    %9 = vector.shape_cast %8 : vector<1x3x128xf32> to vector<3x128xf32>
    %10 = arith.addf %7, %9 : vector<3x128xf32>
    %c0_10 = arith.constant 0 : index
    %c0_11 = arith.constant 0 : index
    %c0_12 = arith.constant 0 : index
    %11 = vector.load %arg6[%c0_10, %c0_11, %c0_12] : memref<1x3x128xf32, #tpu.memory_space<vmem>>, vector<1x3x128xf32>
    %12 = vector.shape_cast %11 : vector<1x3x128xf32> to vector<3x128xf32>
    %13 = vector.shape_cast %10 : vector<3x128xf32> to vector<1x3x128xf32>
    tpu.vector_store %arg6[%c0_10, %c0_11, %c0_12], %13 {strides = array<i32>} : memref<1x3x128xf32, #tpu.memory_space<vmem>>, vector<1x3x128xf32>,
    return
  }
  func.func @transform_0(%arg0: i32, %arg1: i32) -> (i32, i32, i32) {
    %c0_i32 = arith.constant 0 : i32
    %c0_i32_0 = arith.constant 0 : i32
    %c0_i32_1 = arith.constant 0 : i32
    return %arg0, %c0_i32, %c0_i32_0 : i32, i32, i32
  }
  func.func @transform_1(%arg0: i32, %arg1: i32) -> (i32, i32) {
    %c0_i32 = arith.constant 0 : i32
    %c0_i32_0 = arith.constant 0 : i32
    %c0_i32_1 = arith.constant 0 : i32
    return %c0_i32, %c0_i32_0 : i32, i32
  }
  func.func @transform_2(%arg0: i32, %arg1: i32) -> (i32, i32, i32) {
    %c0_i32 = arith.constant 0 : i32
    %c0_i32_0 = arith.constant 0 : i32
    return %arg0, %c0_i32, %arg1 : i32, i32, i32
  }
  func.func @transform_3(%arg0: i32, %arg1: i32) -> (i32, i32, i32) {
    %c0_i32 = arith.constant 0 : i32
    %c0_i32_0 = arith.constant 0 : i32
    return %arg0, %c0_i32, %arg1 : i32, i32, i32
  }
  func.func @transform_4(%arg0: i32, %arg1: i32) -> (i32, i32, i32) {
    %c0_i32 = arith.constant 0 : i32
    %c0_i32_0 = arith.constant 0 : i32
    return %arg0, %c0_i32, %arg1 : i32, i32, i32
  }
}

</mosaic_0001>

<llo_original>
// kernel: tpu_custom_call.1
$region0: #{tpu_custom_call.1}
  #allocation0 [shape = 'u32[]', space=smem, size = 0x4, offset = 0x4, fixed_abs, tag = 'smem constant byte address 0x4 - core index']
  #allocation1 [shape = 'u32[144,128]{1,0:T(1,128)}', space=vmem, size = 0x12000, scoped, tag = 'internal scratch']
  %s0 = inlined_call_operand.vmem [shape: f32[2,3,4], index: 0, kind: input, shape index: {}]
  %s1 = inlined_call_operand.vmem [shape: f32[3,1], index: 1, kind: input, shape index: {}]
  %s2 = inlined_call_operand.vmem [shape: f32[2,4,256], index: 2, kind: input, shape index: {}]
  %s3 = inlined_call_operand.vmem [shape: f32[2,3,256], index: 3, kind: input, shape index: {}]
  %s4 = inlined_call_operand.vmem [shape: f32[2,3,256], index: 4, kind: output, shape index: {}]
  %s5 = sld [smem:[#allocation0]]
  $region49: #{tpu_custom_call.1} parent=0
    _
  %s7 = ssub.s32 1, %s5
  %s8 = scalar_select 0, %s7, %s5
  loop: start=0, step=1, limit=6
  $region2: #{tpu_custom_call.1} parent=0 // loop_pre_header
    _
  $region3: #{tpu_custom_call.1} parent=0 // loop_header
    %s10 = sphi 0, %s14
    %p11 = scmp.ge.s32.totalorder %s10, 6
    %s17 = sphi 0, %s29
    %s18 = sphi 0, %s25
    %s19 = sphi 0, %s17
    %s20 = sphi 0, %s18
    %s21 = sphi 0, %s19
    %s22 = sphi 0, %s20
    %s32 = sphi 0, %s34
    %s35 = sphi 0, %s32
    %s36 = sphi 0, %s35
    %s52 = sphi 0, %s36
    %s56 = sphi 0, %s56
    %s58 = sphi 0, %s56
    %s59 = sphi 0, %s58
    %s73 = sphi 0, %s59
    %s81 = sphi 0, %s83
    %s84 = sphi 0, %s81
    %s85 = sphi 0, %s84
    %s101 = sphi 0, %s85
    %s109 = sphi 0, %s111
    %s112 = sphi 0, %s109
    %s113 = sphi 0, %s112
    %s129 = sphi 0, %s113
    %s137 = sphi 0, %s139
    %s140 = sphi 0, %s137
    %s141 = sphi 0, %s140
    %s157 = sphi 0, %s141
  $region4: #{tpu_custom_call.1} parent=0 // loop_header_branch
    %13 = sbr.rel (%p11) target = $region8
  $region5: #{tpu_custom_call.1} parent=0 // loop_body
    %s15 = ssub.s32 %s10, 1
    %s16 = ssub.s32 %s10, 2
    %s23 = sadd.s32 1, %s18
    %p24 = scmp.ge.s32.totalorder %s23, 2
    %s25 = scalar_select %p24, 0, %s23
    %s26 = sadd.s32 1, %s17
    %s27 = scalar_select %p24, %s26, %s17
    %p28 = scmp.ge.s32.totalorder %s27, 2
    %s29 = scalar_select %p28, 0, %s27
    %s30 = ssub.s32 %s17, %s29
    %p31 = scmp.eq.s32.totalorder %s30, 0
    %s33 = sadd.s32 %s32, 1
    %s34 = scalar_select %p31, %s32, %s33
    %p37 = pneg %p31
    %p38 = scmp.eq.s32.totalorder %s10, 3
    %p39 = por %p37, %p38
    %p40 = scmp.ne.s32.totalorder %s32, %s35
    %p41 = scmp.eq.s32.totalorder %s10, 0
    %p42 = por %p40, %p41
    %p43 = scmp.ne.s32.totalorder %s32, %s35
    %p44 = scmp.eq.s32.totalorder %s15, 3
    %p45 = por %p43, %p44
    %p46 = scmp.ne.s32.totalorder %s35, %s36
    %p47 = scmp.eq.s32.totalorder %s15, 0
    %p48 = por %p46, %p47
    %p49 = scmp.ne.s32.totalorder %s35, %s36
    %p50 = scmp.eq.s32.totalorder %s16, 3
    %p51 = por %p49, %p50
    %p53 = scmp.ne.s32.totalorder %s36, %s52
    %p54 = scmp.eq.s32.totalorder %s16, 0
    %p55 = por %p53, %p54
    %s57 = sadd.s32 %s56, 1
    %p60 = scmp.eq.s32.totalorder %s10, 3
    %p61 = scmp.ne.s32.totalorder %s56, %s58
    %p62 = scmp.eq.s32.totalorder %s10, 0
    %p63 = por %p61, %p62
    %p64 = scmp.ne.s32.totalorder %s56, %s58
    %p65 = scmp.eq.s32.totalorder %s15, 3
    %p66 = por %p64, %p65
    %p67 = scmp.ne.s32.totalorder %s58, %s59
    %p68 = scmp.eq.s32.totalorder %s15, 0
    %p69 = por %p67, %p68
    %p70 = scmp.ne.s32.totalorder %s58, %s59
    %p71 = scmp.eq.s32.totalorder %s16, 3
    %p72 = por %p70, %p71
    %p74 = scmp.ne.s32.totalorder %s59, %s73
    %p75 = scmp.eq.s32.totalorder %s16, 0
    %p76 = por %p74, %p75
    %s77 = ssub.s32 %s17, %s29
    %s78 = ssub.s32 %s18, %s25
    %s79 = sor.u32 %s77, %s78
    %p80 = scmp.eq.s32.totalorder %s79, 0
    %s82 = sadd.s32 %s81, 1
    %s83 = scalar_select %p80, %s81, %s82
    %p86 = pneg %p80
    %p87 = scmp.eq.s32.totalorder %s10, 3
    %p88 = por %p86, %p87
    %p89 = scmp.ne.s32.totalorder %s81, %s84
    %p90 = scmp.eq.s32.totalorder %s10, 0
    %p91 = por %p89, %p90
    %p92 = scmp.ne.s32.totalorder %s81, %s84
    %p93 = scmp.eq.s32.totalorder %s15, 3
    %p94 = por %p92, %p93
    %p95 = scmp.ne.s32.totalorder %s84, %s85
    %p96 = scmp.eq.s32.totalorder %s15, 0
    %p97 = por %p95, %p96
    %p98 = scmp.ne.s32.totalorder %s84, %s85
    %p99 = scmp.eq.s32.totalorder %s16, 3
    %p100 = por %p98, %p99
    %p102 = scmp.ne.s32.totalorder %s85, %s101
    %p103 = scmp.eq.s32.totalorder %s16, 0
    %p104 = por %p102, %p103
    %s105 = ssub.s32 %s17, %s29
    %s106 = ssub.s32 %s18, %s25
    %s107 = sor.u32 %s105, %s106
    %p108 = scmp.eq.s32.totalorder %s107, 0
    %s110 = sadd.s32 %s109, 1
    %s111 = scalar_select %p108, %s109, %s110
    %p114 = pneg %p108
    %p115 = scmp.eq.s32.totalorder %s10, 3
    %p116 = por %p114, %p115
    %p117 = scmp.ne.s32.totalorder %s109, %s112
    %p118 = scmp.eq.s32.totalorder %s10, 0
    %p119 = por %p117, %p118
    %p120 = scmp.ne.s32.totalorder %s109, %s112
    %p121 = scmp.eq.s32.totalorder %s15, 3
    %p122 = por %p120, %p121
    %p123 = scmp.ne.s32.totalorder %s112, %s113
    %p124 = scmp.eq.s32.totalorder %s15, 0
    %p125 = por %p123, %p124
    %p126 = scmp.ne.s32.totalorder %s112, %s113
    %p127 = scmp.eq.s32.totalorder %s16, 3
    %p128 = por %p126, %p127
    %p130 = scmp.ne.s32.totalorder %s113, %s129
    %p131 = scmp.eq.s32.totalorder %s16, 0
    %p132 = por %p130, %p131
    %s133 = ssub.s32 %s17, %s29
    %s134 = ssub.s32 %s18, %s25
    %s135 = sor.u32 %s133, %s134
    %p136 = scmp.eq.s32.totalorder %s135, 0
    %s138 = sadd.s32 %s137, 1
    %s139 = scalar_select %p136, %s137, %s138
    %p142 = pneg %p136
    %p143 = scmp.eq.s32.totalorder %s10, 3
    %p144 = por %p142, %p143
    %p145 = scmp.ne.s32.totalorder %s137, %s140
    %p146 = scmp.eq.s32.totalorder %s10, 0
    %p147 = por %p145, %p146
    %p148 = scmp.ne.s32.totalorder %s137, %s140
    %p149 = scmp.eq.s32.totalorder %s15, 3
    %p150 = por %p148, %p149
    %p151 = scmp.ne.s32.totalorder %s140, %s141
    %p152 = scmp.eq.s32.totalorder %s15, 0
    %p153 = por %p151, %p152
    %p154 = scmp.ne.s32.totalorder %s140, %s141
    %p155 = scmp.eq.s32.totalorder %s16, 3
    %p156 = por %p154, %p155
    %p158 = scmp.ne.s32.totalorder %s141, %s157
    %p159 = scmp.eq.s32.totalorder %s16, 0
    %p160 = por %p158, %p159
    %p161 = scmp.le.s32.totalorder 1, %s10
    %p162 = scmp.lt.s32.totalorder %s10, 5
    %p163 = pnand %p161, %p162
    %p164 = pneg %p163
    // Predicated region
    $region9: #{tpu_custom_call.1} parent=5 // pred_check
      _
    $region10: #{tpu_custom_call.1} parent=5 // pred_check_branch
      %166 = sbr.rel (%p163) target = $region12
    $region11: #{tpu_custom_call.1} parent=5 // pred_region
      %s167 = ssub.s32 %s10, 1
      // Predicated region
      $region13: #{tpu_custom_call.1} parent=11 // pred_check
        %p168 = pneg %p69
      $region14: #{tpu_custom_call.1} parent=11 // pred_check_branch
        %170 = sbr.rel (%p168) target = $region16
      $region15: #{tpu_custom_call.1} parent=11 // pred_region
        _
      $region16: #{tpu_custom_call.1} parent=11 // pred_fallthru
        _
    $region12: #{tpu_custom_call.1} parent=5 // pred_fallthru
      _
    %p171 = scmp.lt.s32.totalorder %s10, 4
    // Predicated region
    $region17: #{tpu_custom_call.1} parent=5 // pred_check
      %p172 = pneg %p171
    $region18: #{tpu_custom_call.1} parent=5 // pred_check_branch
      %174 = sbr.rel (%p172) target = $region20
    $region19: #{tpu_custom_call.1} parent=5 // pred_region
      // Predicated region
      $region21: #{tpu_custom_call.1} parent=19 // pred_check
        %p175 = pneg %p42
      $region22: #{tpu_custom_call.1} parent=19 // pred_check_branch
        %177 = sbr.rel (%p175) target = $region24
      $region23: #{tpu_custom_call.1} parent=19 // pred_region
        %p178 = scmp.lt.s32.totalorder %s17, 1
        %s179 = scalar_select %p178, %s17, 1
        %s180 = smul.addr %s179, 4
        %s181 = scalar_lea.vmem %s0, %s180
      $region24: #{tpu_custom_call.1} parent=19 // pred_fallthru
        _
      // Predicated region
      $region25: #{tpu_custom_call.1} parent=19 // pred_check
        %p182 = pneg %p91
      $region26: #{tpu_custom_call.1} parent=19 // pred_check_branch
        %184 = sbr.rel (%p182) target = $region28
      $region27: #{tpu_custom_call.1} parent=19 // pred_region
        %p185 = scmp.lt.s32.totalorder %s17, 1
        %s186 = scalar_select %p185, %s17, 1
        %p187 = scmp.lt.s32.totalorder %s18, 1
        %s188 = scalar_select %p187, %s18, 1
        %s189 = smul.addr %s186, 2
        %s190 = sadd.s32 %s188, %s189
        %s191 = smul.addr %s190, 4
        %s192 = scalar_lea.vmem %s2, %s191
      $region28: #{tpu_custom_call.1} parent=19 // pred_fallthru
        _
      // Predicated region
      $region29: #{tpu_custom_call.1} parent=19 // pred_check
        %p193 = pneg %p119
      $region30: #{tpu_custom_call.1} parent=19 // pred_check_branch
        %195 = sbr.rel (%p193) target = $region32
      $region31: #{tpu_custom_call.1} parent=19 // pred_region
        %p196 = scmp.lt.s32.totalorder %s17, 1
        %s197 = scalar_select %p196, %s17, 1
        %p198 = scmp.lt.s32.totalorder %s18, 1
        %s199 = scalar_select %p198, %s18, 1
        %s200 = smul.addr %s197, 2
        %s201 = sadd.s32 %s199, %s200
        %s202 = smul.addr %s201, 4
        %s203 = scalar_lea.vmem %s3, %s202
      $region32: #{tpu_custom_call.1} parent=19 // pred_fallthru
        _
    $region20: #{tpu_custom_call.1} parent=5 // pred_fallthru
      _
    %p204 = scmp.le.s32.totalorder 1, %s10
    %p205 = scmp.lt.s32.totalorder %s10, 5
    %p206 = pnand %p204, %p205
    %p207 = pneg %p206
    // Predicated region
    $region33: #{tpu_custom_call.1} parent=5 // pred_check
      _
    $region34: #{tpu_custom_call.1} parent=5 // pred_check_branch
      %209 = sbr.rel (%p206) target = $region36
    $region35: #{tpu_custom_call.1} parent=5 // pred_region
      %s210 = ssub.s32 %s10, 1
      %p211 = scmp.lt.s32.totalorder %s19, 1
      %s212 = scalar_select %p211, %s19, 1
      %s213 = smul.addr %s212, 4
      %s214 = scalar_lea.vmem %s0, %s213
      %p215 = pneg %p48
      %p216 = pneg %p45
      %p217 = pneg %p69
      %p218 = pneg %p66
      %p219 = scmp.lt.s32.totalorder %s19, 1
      %s220 = scalar_select %p219, %s19, 1
      %p221 = scmp.lt.s32.totalorder %s20, 1
      %s222 = scalar_select %p221, %s20, 1
      %s223 = smul.addr %s220, 2
      %s224 = sadd.s32 %s222, %s223
      %s225 = smul.addr %s224, 4
      %s226 = scalar_lea.vmem %s2, %s225
      %p227 = pneg %p97
      %p228 = pneg %p94
      %p229 = scmp.lt.s32.totalorder %s19, 1
      %s230 = scalar_select %p229, %s19, 1
      %p231 = scmp.lt.s32.totalorder %s20, 1
      %s232 = scalar_select %p231, %s20, 1
      %s233 = smul.addr %s230, 2
      %s234 = sadd.s32 %s232, %s233
      %s235 = smul.addr %s234, 4
      %s236 = scalar_lea.vmem %s3, %s235
      %p237 = pneg %p125
      %p238 = pneg %p122
      %p239 = pneg %p153
      %p240 = pneg %p150
      %p241 = scmp.lt.s32.totalorder %s19, 1
      %s242 = scalar_select %p241, %s19, 1
      %p243 = scmp.lt.s32.totalorder %s20, 1
      %s244 = scalar_select %p243, %s20, 1
      %s245 = smul.addr %s242, 2
      %s246 = sadd.s32 %s244, %s245
      %s247 = smul.addr %s246, 4
      %s248 = scalar_lea.vmem %s4, %s247
      %p249 = scmp.lt.s32.totalorder %s19, 1
      %s250 = scalar_select %p249, %s19, 1
      %s251 = smul.addr %s250, 4
      %s252 = scalar_lea.vmem %s0, %s251
      %p253 = scmp.lt.s32.totalorder %s19, 1
      %s254 = scalar_select %p253, %s19, 1
      %p255 = scmp.lt.s32.totalorder %s20, 1
      %s256 = scalar_select %p255, %s20, 1
      %s257 = smul.addr %s254, 2
      %s258 = sadd.s32 %s256, %s257
      %s259 = smul.addr %s258, 4
      %s260 = scalar_lea.vmem %s2, %s259
      %p261 = scmp.lt.s32.totalorder %s19, 1
      %s262 = scalar_select %p261, %s19, 1
      %p263 = scmp.lt.s32.totalorder %s20, 1
      %s264 = scalar_select %p263, %s20, 1
      %s265 = smul.addr %s262, 2
      %s266 = sadd.s32 %s264, %s265
      %s267 = smul.addr %s266, 4
      %s268 = scalar_lea.vmem %s3, %s267
      %p269 = scmp.lt.s32.totalorder %s19, 1
      %s270 = scalar_select %p269, %s19, 1
      %p271 = scmp.lt.s32.totalorder %s20, 1
      %s272 = scalar_select %p271, %s20, 1
      %s273 = smul.addr %s270, 2
      %s274 = sadd.s32 %s272, %s273
      %s275 = smul.addr %s274, 4
      %s276 = scalar_lea.vmem %s4, %s275
      %v277 = vld [vmem:[%s252] sm:$0x7]
      %v278 = vld [vmem:[%s260] sm:$0xf]
      %v279 = vld [vmem:[%s1] sm:$0x7]
      %281 = vset.pattern.permute.xlu0 0
      %282 = vperm.xlu0 %281, %v279
      %v283 = vpop.permute.xlu0 %282
      %vm285 = vcmask 31744
      %v287 = vsel %vm285, %v277, 0
      %vm289 = vcmask 1043456
      %v291 = vsel %vm289, %v278, 0
      %293 = vmatprep.subr.mxu0 0.0
      %294 = vmatpush1.msra.mxu0 %v291
      %295 = vmatprep.subr.mxu0 0.0
      %296 = vmatpush1.msra.mxu0 0.0
      %297 = vmatprep.subr.mxu0 0.0
      %298 = vmatpush1.msra.mxu0 0.0
      %299 = vmatprep.subr.mxu0 0.0
      %300 = vmatpush1.msra.mxu0 0.0
      %301 = vmatprep.subr.mxu0 0.0
      %302 = vmatpush1.msra.mxu0 0.0
      %303 = vmatprep.subr.mxu0 0.0
      %304 = vmatpush1.msra.mxu0 0.0
      %305 = vmatprep.subr.mxu0 0.0
      %306 = vmatpush1.msra.mxu0 0.0
      %307 = vmatprep.subr.mxu0 0.0
      %308 = vmatpush1.msra.mxu0 0.0
      %309 = vmatprep.subr.mxu0 0.0
      %310 = vmatpush1.msra.mxu0 0.0
      %311 = vmatprep.subr.mxu0 0.0
      %312 = vmatpush1.msra.mxu0 0.0
      %313 = vmatprep.subr.mxu0 0.0
      %314 = vmatpush1.msra.mxu0 0.0
      %315 = vmatprep.subr.mxu0 0.0
      %316 = vmatpush1.msra.mxu0 0.0
      %317 = vmatprep.subr.mxu0 0.0
      %318 = vmatpush1.msra.mxu0 0.0
      %319 = vmatprep.subr.mxu0 0.0
      %320 = vmatpush1.msra.mxu0 0.0
      %321 = vmatprep.subr.mxu0 0.0
      %322 = vmatpush1.msra.mxu0 0.0
      %323 = vmatprep.subr.mxu0 0.0
      %324 = vmatpush1.msra.mxu0 0.0
      %325 = vmatprep.subr.mxu0 0.0
      %326 = vmatpush1.msra.mxu0 0.0
      %327 = vmatprep.subr.mxu0 0.0
      %328 = vmatpush1.msra.mxu0 0.0
      %329 = vmatprep.subr.mxu0 0.0
      %330 = vmatpush1.msra.mxu0 0.0
      %331 = vmatprep.subr.mxu0 0.0
      %332 = vmatpush1.msra.mxu0 0.0
      %333 = vmatprep.subr.mxu0 0.0
      %334 = vmatpush1.msra.mxu0 0.0
      %335 = vmatprep.subr.mxu0 0.0
      %336 = vmatpush1.msra.mxu0 0.0
      %337 = vmatprep.subr.mxu0 0.0
      %338 = vmatpush1.msra.mxu0 0.0
      %339 = vmatprep.subr.mxu0 0.0
      %340 = vmatpush1.msra.mxu0 0.0
      %341 = vmatprep.subr.mxu0 0.0
      %342 = vmatpush1.msra.mxu0 0.0
      %343 = vmatprep.subr.mxu0 0.0
      %344 = vmatpush1.msra.mxu0 0.0
      %345 = vmatprep.subr.mxu0 0.0
      %346 = vmatpush1.msra.mxu0 0.0
      %347 = vmatprep.subr.mxu0 0.0
      %348 = vmatpush1.msra.mxu0 0.0
      %349 = vmatprep.subr.mxu0 0.0
      %350 = vmatpush1.msra.mxu0 0.0
      %351 = vmatprep.subr.mxu0 0.0
      %352 = vmatpush1.msra.mxu0 0.0
      %353 = vmatprep.subr.mxu0 0.0
      %354 = vmatpush1.msra.mxu0 0.0
      %355 = vmatprep.subr.mxu0 0.0
      %356 = vmatpush1.msra.mxu0 0.0
      %357 = vmatprep.mubr.f32.mxu0 0.0
      %358 = vmatmul.mubr.f32.gmra.mrb[0].mxu0 %v287
      %v359 = vpop.f32.mrb[0].mxu0
      %v360 = vadd.f32 %v283, %v359
      %v361 = vpop.f32.mrb[0].mxu0
      %362 = vdwg.mxu0
      %v363 = vld [vmem:[%s268] sm:$0x7]
      %v364 = vadd.f32 %v360, %v363
      %365 = vst [vmem:[%s276] sm:$0x7] %v364
      %p366 = scmp.lt.s32.totalorder %s19, 1
      %s367 = scalar_select %p366, %s19, 1
      %p368 = scmp.lt.s32.totalorder %s20, 1
      %s369 = scalar_select %p368, %s20, 1
      %s370 = smul.addr %s367, 2
      %s371 = sadd.s32 %s369, %s370
      %s372 = smul.addr %s371, 4
      %s373 = scalar_lea.vmem %s4, %s372
      // Predicated region
      $region37: #{tpu_custom_call.1} parent=35 // pred_check
        %p374 = pneg %p150
      $region38: #{tpu_custom_call.1} parent=35 // pred_check_branch
        %376 = sbr.rel (%p374) target = $region40
      $region39: #{tpu_custom_call.1} parent=35 // pred_region
        _
      $region40: #{tpu_custom_call.1} parent=35 // pred_fallthru
        _
    $region36: #{tpu_custom_call.1} parent=5 // pred_fallthru
      _
    %p377 = scmp.le.s32.totalorder 2, %s10
    // Predicated region
    $region41: #{tpu_custom_call.1} parent=5 // pred_check
      %p378 = pneg %p377
    $region42: #{tpu_custom_call.1} parent=5 // pred_check_branch
      %380 = sbr.rel (%p378) target = $region44
    $region43: #{tpu_custom_call.1} parent=5 // pred_region
      %s381 = ssub.s32 %s10, 2
      // Predicated region
      $region45: #{tpu_custom_call.1} parent=43 // pred_check
        %p382 = pneg %p156
      $region46: #{tpu_custom_call.1} parent=43 // pred_check_branch
        %384 = sbr.rel (%p382) target = $region48
      $region47: #{tpu_custom_call.1} parent=43 // pred_region
        %p385 = scmp.lt.s32.totalorder %s21, 1
        %s386 = scalar_select %p385, %s21, 1
        %p387 = scmp.lt.s32.totalorder %s22, 1
        %s388 = scalar_select %p387, %s22, 1
        %s389 = smul.addr %s386, 2
        %s390 = sadd.s32 %s388, %s389
        %s391 = smul.addr %s390, 4
        %s392 = scalar_lea.vmem %s4, %s391
      $region48: #{tpu_custom_call.1} parent=43 // pred_fallthru
        _
    $region44: #{tpu_custom_call.1} parent=5 // pred_fallthru
      _
  $region6: #{tpu_custom_call.1} parent=0 // loop_footer
    %s14 = sadd.s32 1, %s10
  $region7: #{tpu_custom_call.1} parent=0 // loop_footer_branch
    %9 = sbr.rel target = $region3
  $region8: #{tpu_custom_call.1} parent=0 // loop_exit
    _

</llo_original>
